<compile_context>
chip_gen: v6e
topology: v6e:2x2x1
jax: 0.10.0
libtpu: 0.0.40
codegen_flags: <defaults>
</compile_context>

<pallas_src>
import jax
import jax.numpy as jnp
from jax.experimental import pallas as pl
from jax.experimental.pallas import tpu as pltpu


def _normalize_kernel(a_ref, b_ref, x_ref, o_ref):
    # a_ref, b_ref: (1,) f32 scalars in SMEM; x_ref/o_ref: (TM, L) tile in VMEM.
    a = a_ref[0]
    b = b_ref[0]
    x = x_ref[...].astype(jnp.float32)          # f32 compute path (v5e-friendly)
    o_ref[...] = (a * x + b).astype(o_ref.dtype)


def _round_up(v, m):
    return ((v + m - 1) // m) * m


def normalize_layer(x, a, b, *, lane_width=512, max_block_rows=512):
    """y = a * x + b, elementwise, via a tiled lane-dense Pallas kernel."""
    orig_shape = x.shape
    orig_dtype = x.dtype
    n = x.size

    # Lane-dense 2D slab: (rows_padded, L) with L a large multiple of 128.
    L = lane_width
    rows = max(1, -(-n // L))                      # ceil(n / L)
    tm = min(max_block_rows, _round_up(rows, 8))   # block rows: <=512, mult of 8
    rows_padded = _round_up(rows, tm)
    n_padded = rows_padded * L

    flat = x.reshape(-1)
    if n_padded != n:
        flat = jnp.pad(flat, (0, n_padded - n))
    x2 = flat.reshape(rows_padded, L)

    # Scalars stay in f32 regardless of activation dtype.
    a_arr = jnp.asarray(a, dtype=jnp.float32).reshape(1)
    b_arr = jnp.asarray(b, dtype=jnp.float32).reshape(1)

    grid = (rows_padded // tm,)

    out2 = pl.pallas_call(
        _normalize_kernel,
        out_shape=jax.ShapeDtypeStruct((rows_padded, L), orig_dtype),
        grid=grid,
        in_specs=[
            pl.BlockSpec(memory_space=pltpu.SMEM),        # a (whole, every step)
            pl.BlockSpec(memory_space=pltpu.SMEM),        # b
            pl.BlockSpec((tm, L), lambda i: (i, 0)),      # x tile
        ],
        out_specs=pl.BlockSpec((tm, L), lambda i: (i, 0)),
        compiler_params=pltpu.CompilerParams(
            dimension_semantics=("parallel",),            # v7x: shard across 2 TCs
        ),
    )(a_arr, b_arr, x2)

    return out2.reshape(-1)[:n].reshape(orig_shape)


if __name__ == "__main__":
    # Deterministic "parameters" (the module's __init__ takes a, b scalars).
    a = 2.5
    b = -0.75

    key = jax.random.PRNGKey(0)
    # NCHW-style input, small shapes: batch=2, channels=4, H=16, W=16
    x = jax.random.normal(key, (2, 4, 16, 16), dtype=jnp.float32)

    y = normalize_layer(x, a, b)
    y = jax.block_until_ready(y)

    # Correctness check against plain-JAX reference.
    ref = a * x + b
    assert y.shape == x.shape and y.dtype == x.dtype
    assert jnp.allclose(y, ref, atol=1e-6, rtol=1e-6), "mismatch vs reference"

    print("KERNEL_OK")
</pallas_src>

<mosaic_0001>
module attributes {stable_mosaic.version = 11 : i64} {
  func.func @_normalize_kernel(%arg0: i32, %arg1: memref<1xf32, #tpu.memory_space<smem>>, %arg2: memref<1xf32, #tpu.memory_space<smem>>, %arg3: memref<8x512xf32, #tpu.memory_space<vmem>>, %arg4: memref<8x512xf32, #tpu.memory_space<vmem>>) attributes {dimension_semantics = [#tpu.dimension_semantics<parallel>], iteration_bounds = array<i64: 1>, scalar_prefetch = 0 : i64, scratch_operands = 0 : i64, tpu.core_type = #tpu.core_type<tc>, window_params = [{transform_indices = @transform_0, window_bounds = array<i64: 1>}, {transform_indices = @transform_1, window_bounds = array<i64: 1>}, {transform_indices = @transform_2, window_bounds = array<i64: 8, 512>}, {transform_indices = @transform_3, window_bounds = array<i64: 8, 512>}]} {
    %c0 = arith.constant 0 : index
    %0 = memref.load %arg1[%c0] : memref<1xf32, #tpu.memory_space<smem>>
    %c0_0 = arith.constant 0 : index
    %1 = memref.load %arg2[%c0_0] : memref<1xf32, #tpu.memory_space<smem>>
    %c0_1 = arith.constant 0 : index
    %c0_2 = arith.constant 0 : index
    %2 = vector.load %arg3[%c0_1, %c0_2] : memref<8x512xf32, #tpu.memory_space<vmem>>, vector<8x512xf32>
    %3 = vector.broadcast %0 : f32 to vector<8x512xf32>
    %4 = arith.mulf %3, %2 : vector<8x512xf32>
    %5 = vector.broadcast %1 : f32 to vector<8x512xf32>
    %6 = arith.addf %4, %5 : vector<8x512xf32>
    %c0_3 = arith.constant 0 : index
    %c0_4 = arith.constant 0 : index
    %7 = vector.load %arg4[%c0_3, %c0_4] : memref<8x512xf32, #tpu.memory_space<vmem>>, vector<8x512xf32>
    tpu.vector_store %arg4[%c0_3, %c0_4], %6 {strides = array<i32>} : memref<8x512xf32, #tpu.memory_space<vmem>>, vector<8x512xf32>,
    return
  }
  func.func @transform_0(%arg0: i32) -> i32 {
    %c0_i32 = arith.constant 0 : i32
    %c0_i32_0 = arith.constant 0 : i32
    return %c0_i32 : i32
  }
  func.func @transform_1(%arg0: i32) -> i32 {
    %c0_i32 = arith.constant 0 : i32
    %c0_i32_0 = arith.constant 0 : i32
    return %c0_i32 : i32
  }
  func.func @transform_2(%arg0: i32) -> (i32, i32) {
    %c0_i32 = arith.constant 0 : i32
    %c0_i32_0 = arith.constant 0 : i32
    return %arg0, %c0_i32 : i32, i32
  }
  func.func @transform_3(%arg0: i32) -> (i32, i32) {
    %c0_i32 = arith.constant 0 : i32
    %c0_i32_0 = arith.constant 0 : i32
    return %arg0, %c0_i32 : i32, i32
  }
}

</mosaic_0001>

<llo_original>
// kernel: tpu_custom_call.1
$region0: #{tpu_custom_call.1}
  #allocation0 [shape = 'u32[]', space=smem, size = 0x4, offset = 0x4, fixed_abs, tag = 'smem constant byte address 0x4 - core index']
  #allocation1 [shape = 'u32[144,128]{1,0:T(1,128)}', space=vmem, size = 0x12000, scoped, tag = 'internal scratch']
  #allocation2 [shape = 'f32[1]{0:T(128)S(6)}', space=smem, size = 0x200, scoped, tag = 'scoped memory for tpu_custom_call.1']
  #allocation3 [shape = 'f32[1]{0:T(128)S(6)}', space=smem, size = 0x200, scoped, tag = 'scoped memory for tpu_custom_call.1']
  %s0 = inlined_call_operand.<no memory space> [shape: f32[1], index: 0, kind: input, shape index: {}]
  %s1 = inlined_call_operand.<no memory space> [shape: f32[1], index: 1, kind: input, shape index: {}]
  %s2 = inlined_call_operand.hbm [shape: f32[8,512], index: 2, kind: input, shape index: {}]
  %s3 = inlined_call_operand.hbm [shape: f32[8,512], index: 3, kind: output, shape index: {}]
  %s4 = sld [smem:[#allocation0]]
  $region26: #{tpu_custom_call.1} parent=0
    _
  %s6 = ssub.s32 1, %s4
  %s7 = scalar_select 0, %s6, %s4
  %8 = sst [smem:[#allocation2]] %s0
  %9 = sst [smem:[#allocation3]] %s1
  $region1: #{tpu_custom_call.1} parent=0
    #allocation4 [shape = 'u8[16384]{0}', space=vmem, size = 0x4000, scoped, tag = 'input window, operand 2, single buffered']
    #allocation5 [shape = 's32[1]{0}', space=sflag, size = 0x4, scoped, tag = 'scoped memory for tpu_custom_call.1']
    #allocation6 [shape = 's32[1]{0}', space=sflag, size = 0x4, scoped, tag = 'scoped memory for tpu_custom_call.1']
    #allocation7 [shape = 'u8[16384]{0}', space=vmem, size = 0x4000, scoped, tag = 'output window, operand 0, single buffered']
    %10 = vsyncpa [#allocation5], 0
    %11 = vsyncpa [#allocation6], 0
    // Predicated region
    $region2: #{tpu_custom_call.1} parent=1 // pred_check
      _
    $region3: #{tpu_custom_call.1} parent=1 // pred_check_branch
      %13 = sbr.rel (0) target = $region5
    $region4: #{tpu_custom_call.1} parent=1 // pred_region
      _
    $region5: #{tpu_custom_call.1} parent=1 // pred_fallthru
      _
    // Predicated region
    $region6: #{tpu_custom_call.1} parent=1 // pred_check
      _
    $region7: #{tpu_custom_call.1} parent=1 // pred_check_branch
      %15 = sbr.rel (0) target = $region9
    $region8: #{tpu_custom_call.1} parent=1 // pred_region
      _
    $region9: #{tpu_custom_call.1} parent=1 // pred_fallthru
      _
    // Predicated region
    $region10: #{tpu_custom_call.1} parent=1 // pred_check
      _
    $region11: #{tpu_custom_call.1} parent=1 // pred_check_branch
      %17 = sbr.rel (0) target = $region13
    $region12: #{tpu_custom_call.1} parent=1 // pred_region
      %s19 = ssub.s32 512, 512
      %20 = vsyncadd [#allocation5], %s19
      %s22 = sshll.u32 [#allocation4], 4
      %s23 = int_to_ptr.vmem [resolvable:$true] %s22
      %25 = dma.hbm_to_vmem [thread:$0]  %s2, 512, %s23, [#allocation5]
    $region13: #{tpu_custom_call.1} parent=1 // pred_fallthru
      _
    // Predicated region
    $region14: #{tpu_custom_call.1} parent=1 // pred_check
      _
    $region15: #{tpu_custom_call.1} parent=1 // pred_check_branch
      %27 = sbr.rel (0) target = $region17
    $region16: #{tpu_custom_call.1} parent=1 // pred_region
      %28 = dma.done [#allocation5], 512
    $region17: #{tpu_custom_call.1} parent=1 // pred_fallthru
      _
    %s29 = sld [smem:[#allocation2]]
    %s30 = sld [smem:[#allocation3]]
    %v31 = vld [vmem:[#allocation4] sm:$0xff]
    %v32 = vld [vmem:[#allocation4 + $0x8] sm:$0xff]
    %v33 = vld [vmem:[#allocation4 + $0x10] sm:$0xff]
    %v34 = vld [vmem:[#allocation4 + $0x18] sm:$0xff]
    %v35 = vstv %s29
    %v36 = vmul.f32 %v35, %v31
    %v37 = vmul.f32 %v35, %v32
    %v38 = vmul.f32 %v35, %v33
    %v39 = vmul.f32 %v35, %v34
    %v40 = vstv %s30
    %v41 = vadd.f32 %v36, %v40
    %v42 = vadd.f32 %v37, %v40
    %v43 = vadd.f32 %v38, %v40
    %v44 = vadd.f32 %v39, %v40
    %45 = vst [vmem:[#allocation7] sm:$0xff] %v41
    %46 = vst [vmem:[#allocation7 + $0x8] sm:$0xff] %v42
    %47 = vst [vmem:[#allocation7 + $0x10] sm:$0xff] %v43
    %48 = vst [vmem:[#allocation7 + $0x18] sm:$0xff] %v44
    // Predicated region
    $region18: #{tpu_custom_call.1} parent=1 // pred_check
      _
    $region19: #{tpu_custom_call.1} parent=1 // pred_check_branch
      %50 = sbr.rel (0) target = $region21
    $region20: #{tpu_custom_call.1} parent=1 // pred_region
      %s52 = ssub.s32 512, 512
      %53 = vsyncadd [#allocation6], %s52
      %s55 = sshll.u32 [#allocation7], 4
      %s56 = int_to_ptr.vmem [resolvable:$true] %s55
      %58 = dma.vmem_to_hbm [thread:$0]  %s56, 512, %s3, [#allocation6]
    $region21: #{tpu_custom_call.1} parent=1 // pred_fallthru
      _
    // Predicated region
    $region22: #{tpu_custom_call.1} parent=1 // pred_check
      _
    $region23: #{tpu_custom_call.1} parent=1 // pred_check_branch
      %60 = sbr.rel (0) target = $region25
    $region24: #{tpu_custom_call.1} parent=1 // pred_region
      %61 = dma.done [#allocation6], 512
    $region25: #{tpu_custom_call.1} parent=1 // pred_fallthru
      _
    %62 = vsyncpa [#allocation5], 1
    %63 = vsyncpa [#allocation6], 1

</llo_original>
